<compile_context>
chip_gen: v7x
topology: tpu7x:2x2x1
jax: 0.10.0
libtpu: 0.0.40
codegen_flags: <defaults>
</compile_context>

<pallas_src>
import functools

import jax
import jax.numpy as jnp
from jax.experimental import pallas as pl
from jax.experimental.pallas import tpu as pltpu


def _triplet_loss_kernel(a_ref, p_ref, n_ref, out_ref, acc_ref, *,
                         margin, eps, batch, tile_b):
    i = pl.program_id(0)

    @pl.when(i == 0)
    def _():
        acc_ref[...] = jnp.zeros_like(acc_ref)

    a = a_ref[...].astype(jnp.float32)
    p = p_ref[...].astype(jnp.float32)
    n = n_ref[...].astype(jnp.float32)

    # F.pairwise_distance(x1, x2): ||x1 - x2 + eps||_2 along last dim.
    # Keep reductions 2-D ((TB, 1)) to stay lane/sublane-native.
    dpos = jnp.sqrt(jnp.sum(jnp.square(a - p + eps), axis=-1, keepdims=True))
    dneg = jnp.sqrt(jnp.sum(jnp.square(a - n + eps), axis=-1, keepdims=True))

    loss = jnp.maximum(dpos - dneg + margin, 0.0)            # (TB, 1)

    # Mask rows belonging to the zero-padded tail of the last tile.
    row = i * tile_b + jax.lax.broadcasted_iota(jnp.int32, (tile_b, 1), 0)
    loss = jnp.where(row < batch, loss, 0.0)

    # Accumulate per-tile sum into the resident (1, 1) scratch.
    acc_ref[...] += jnp.sum(loss, axis=0, keepdims=True)

    @pl.when(i == pl.num_programs(0) - 1)
    def _():
        out_ref[...] = acc_ref[...] * (1.0 / batch)


def _pick_tile_b(B, D, itemsize=4):
    """Largest batch tile such that 3 inputs x 2 buffers fit ~24 MiB VMEM."""
    vmem_budget = 24 * 1024 * 1024
    max_tb = max(8, vmem_budget // (3 * 2 * D * itemsize))
    tb = min(max(B, 8), max_tb, 4096)
    tb = max(8, (tb // 8) * 8)          # sublane-aligned
    return tb


def triplet_loss(anchor, patches, negative, margin=1.0):
    """Pallas TPU implementation of TripletLoss.forward.

    anchor, patches, negative: (B, D) arrays.
    Returns a scalar float32 loss (mean over batch of the triplet hinge).
    """
    assert anchor.shape == patches.shape == negative.shape
    B, D = anchor.shape

    tb = _pick_tile_b(B, D)
    b_pad = pl.cdiv(B, tb) * tb
    if b_pad != B:
        pad = ((0, b_pad - B), (0, 0))
        anchor = jnp.pad(anchor, pad)
        patches = jnp.pad(patches, pad)
        negative = jnp.pad(negative, pad)
    num_tiles = b_pad // tb

    kernel = functools.partial(
        _triplet_loss_kernel,
        margin=float(margin), eps=1e-6, batch=int(B), tile_b=int(tb))

    out = pl.pallas_call(
        kernel,
        out_shape=jax.ShapeDtypeStruct((1, 1), jnp.float32),
        grid=(num_tiles,),
        in_specs=[
            pl.BlockSpec((tb, D), lambda i: (i, 0)),
            pl.BlockSpec((tb, D), lambda i: (i, 0)),
            pl.BlockSpec((tb, D), lambda i: (i, 0)),
        ],
        out_specs=pl.BlockSpec((1, 1), lambda i: (0, 0)),
        scratch_shapes=[pltpu.VMEM((1, 1), jnp.float32)],
        compiler_params=pltpu.CompilerParams(
            dimension_semantics=("arbitrary",)),  # resident accumulator
    )(anchor, patches, negative)

    return out[0, 0]


def _ref_triplet_loss(a, p, n, margin=1.0, eps=1e-6):
    dpos = jnp.sqrt(jnp.sum(jnp.square(a - p + eps), axis=-1))
    dneg = jnp.sqrt(jnp.sum(jnp.square(a - n + eps), axis=-1))
    return jnp.mean(jnp.maximum(dpos - dneg + margin, 0.0))


if __name__ == "__main__":
    key = jax.random.PRNGKey(0)

    # Case 1: small embedding batch (matches the module's typical use).
    k_a, k_p, k_n = jax.random.split(key, 3)
    B, D = 8, 32
    anchor = jax.random.normal(k_a, (B, D), dtype=jnp.float32)
    patches = jax.random.normal(k_p, (B, D), dtype=jnp.float32)
    negative = jax.random.normal(k_n, (B, D), dtype=jnp.float32)

    loss = jax.block_until_ready(triplet_loss(anchor, patches, negative, 1.0))
    expected = _ref_triplet_loss(anchor, patches, negative, 1.0)
    assert jnp.allclose(loss, expected, rtol=1e-5, atol=1e-5), (loss, expected)

    # Case 2: batch not a multiple of the tile — exercises padding + masking
    # and a multi-step grid with the resident accumulator.
    k2 = jax.random.PRNGKey(1)
    k_a2, k_p2, k_n2 = jax.random.split(k2, 3)
    B2, D2 = 20, 256
    a2 = jax.random.normal(k_a2, (B2, D2), dtype=jnp.float32)
    p2 = jax.random.normal(k_p2, (B2, D2), dtype=jnp.float32)
    n2 = jax.random.normal(k_n2, (B2, D2), dtype=jnp.float32)

    loss2 = jax.block_until_ready(triplet_loss(a2, p2, n2, 0.5))
    expected2 = _ref_triplet_loss(a2, p2, n2, 0.5)
    assert jnp.allclose(loss2, expected2, rtol=1e-5, atol=1e-5), (loss2, expected2)

    print("KERNEL_OK")
</pallas_src>

<mosaic_0001>
module attributes {stable_mosaic.version = 11 : i64} {
  func.func @_triplet_loss_kernel(%arg0: i32, %arg1: memref<8x32xf32, #tpu.memory_space<vmem>>, %arg2: memref<8x32xf32, #tpu.memory_space<vmem>>, %arg3: memref<8x32xf32, #tpu.memory_space<vmem>>, %arg4: memref<1x1xf32, #tpu.memory_space<vmem>>, %arg5: memref<1x1xf32, #tpu.memory_space<vmem>>) attributes {dimension_semantics = [#tpu.dimension_semantics<arbitrary>], iteration_bounds = array<i64: 1>, scalar_prefetch = 0 : i64, scratch_operands = 1 : i64, tpu.core_type = #tpu.core_type<tc>, window_params = [{transform_indices = @transform_0, window_bounds = array<i64: 8, 32>}, {transform_indices = @transform_1, window_bounds = array<i64: 8, 32>}, {transform_indices = @transform_2, window_bounds = array<i64: 8, 32>}, {pipeline_mode = #tpu.pipeline_mode<synchronous>, transform_indices = @transform_3, window_bounds = array<i64: 1, 1>}]} {
    %c0_i32 = arith.constant 0 : i32
    %0 = arith.cmpi eq, %arg0, %c0_i32 : i32
    %1 = arith.extui %0 : i1 to i32
    %c0_i32_0 = arith.constant 0 : i32
    %2 = arith.cmpi ne, %1, %c0_i32_0 : i32
    scf.if %2 {
      %cst_20 = arith.constant 0.000000e+00 : f32
      %41 = vector.broadcast %cst_20 : f32 to vector<1x1xf32>
      %c0_21 = arith.constant 0 : index
      %c0_22 = arith.constant 0 : index
      %42 = vector.load %arg5[%c0_21, %c0_22] : memref<1x1xf32, #tpu.memory_space<vmem>>, vector<1x1xf32>
      tpu.vector_store %arg5[%c0_21, %c0_22], %41 {strides = array<i32>} : memref<1x1xf32, #tpu.memory_space<vmem>>, vector<1x1xf32>,
    } else {
    }
    %c0 = arith.constant 0 : index
    %c0_1 = arith.constant 0 : index
    %3 = vector.load %arg1[%c0, %c0_1] : memref<8x32xf32, #tpu.memory_space<vmem>>, vector<8x32xf32>
    %c0_2 = arith.constant 0 : index
    %c0_3 = arith.constant 0 : index
    %4 = vector.load %arg2[%c0_2, %c0_3] : memref<8x32xf32, #tpu.memory_space<vmem>>, vector<8x32xf32>
    %c0_4 = arith.constant 0 : index
    %c0_5 = arith.constant 0 : index
    %5 = vector.load %arg3[%c0_4, %c0_5] : memref<8x32xf32, #tpu.memory_space<vmem>>, vector<8x32xf32>
    %6 = arith.subf %3, %4 : vector<8x32xf32>
    %cst = arith.constant 9.99999997E-7 : f32
    %7 = vector.broadcast %cst : f32 to vector<8x32xf32>
    %8 = arith.addf %6, %7 : vector<8x32xf32>
    %9 = arith.mulf %8, %8 : vector<8x32xf32>
    %cst_6 = arith.constant dense<0.000000e+00> : vector<8xf32>
    %10 = vector.multi_reduction <add>, %9, %cst_6 [1] : vector<8x32xf32> to vector<8xf32>
    %11 = vector.shape_cast %10 : vector<8xf32> to vector<8x1xf32>
    %12 = math.sqrt %11 : vector<8x1xf32>
    %13 = arith.subf %3, %5 : vector<8x32xf32>
    %cst_7 = arith.constant 9.99999997E-7 : f32
    %14 = vector.broadcast %cst_7 : f32 to vector<8x32xf32>
    %15 = arith.addf %13, %14 : vector<8x32xf32>
    %16 = arith.mulf %15, %15 : vector<8x32xf32>
    %cst_8 = arith.constant dense<0.000000e+00> : vector<8xf32>
    %17 = vector.multi_reduction <add>, %16, %cst_8 [1] : vector<8x32xf32> to vector<8xf32>
    %18 = vector.shape_cast %17 : vector<8xf32> to vector<8x1xf32>
    %19 = math.sqrt %18 : vector<8x1xf32>
    %20 = arith.subf %12, %19 : vector<8x1xf32>
    %cst_9 = arith.constant 1.000000e+00 : f32
    %21 = vector.broadcast %cst_9 : f32 to vector<8x1xf32>
    %22 = arith.addf %20, %21 : vector<8x1xf32>
    %cst_10 = arith.constant 0.000000e+00 : f32
    %23 = vector.broadcast %cst_10 : f32 to vector<8x1xf32>
    %24 = arith.maximumf %22, %23 : vector<8x1xf32>
    %c8_i32 = arith.constant 8 : i32
    %25 = arith.muli %arg0, %c8_i32 : i32
    %26 = tpu.iota {dimensions = array<i32: 0>} : vector<8x1xi32>
    %27 = vector.broadcast %25 : i32 to vector<8x1xi32>
    %28 = arith.addi %27, %26 : vector<8x1xi32>
    %c8_i32_11 = arith.constant 8 : i32
    %29 = vector.broadcast %c8_i32_11 : i32 to vector<8x1xi32>
    %30 = arith.cmpi slt, %28, %29 : vector<8x1xi32>
    %cst_12 = arith.constant 0.000000e+00 : f32
    %31 = vector.broadcast %cst_12 : f32 to vector<8x1xf32>
    %32 = arith.select %30, %24, %31 : vector<8x1xi1>, vector<8x1xf32>
    %c0_13 = arith.constant 0 : index
    %c0_14 = arith.constant 0 : index
    %33 = vector.load %arg5[%c0_13, %c0_14] : memref<1x1xf32, #tpu.memory_space<vmem>>, vector<1x1xf32>
    %cst_15 = arith.constant dense<0.000000e+00> : vector<1xf32>
    %34 = vector.multi_reduction <add>, %32, %cst_15 [0] : vector<8x1xf32> to vector<1xf32>
    %35 = vector.shape_cast %34 : vector<1xf32> to vector<1x1xf32>
    %36 = arith.addf %33, %35 : vector<1x1xf32>
    %c0_16 = arith.constant 0 : index
    %c0_17 = arith.constant 0 : index
    %37 = vector.load %arg5[%c0_16, %c0_17] : memref<1x1xf32, #tpu.memory_space<vmem>>, vector<1x1xf32>
    tpu.vector_store %arg5[%c0_16, %c0_17], %36 {strides = array<i32>} : memref<1x1xf32, #tpu.memory_space<vmem>>, vector<1x1xf32>,
    %c0_i32_18 = arith.constant 0 : i32
    %38 = arith.cmpi eq, %arg0, %c0_i32_18 : i32
    %39 = arith.extui %38 : i1 to i32
    %c0_i32_19 = arith.constant 0 : i32
    %40 = arith.cmpi ne, %39, %c0_i32_19 : i32
    scf.if %40 {
      %c0_20 = arith.constant 0 : index
      %c0_21 = arith.constant 0 : index
      %41 = vector.load %arg5[%c0_20, %c0_21] : memref<1x1xf32, #tpu.memory_space<vmem>>, vector<1x1xf32>
      %cst_22 = arith.constant 1.250000e-01 : f32
      %42 = vector.broadcast %cst_22 : f32 to vector<1x1xf32>
      %43 = arith.mulf %41, %42 : vector<1x1xf32>
      %c0_23 = arith.constant 0 : index
      %c0_24 = arith.constant 0 : index
      %44 = vector.load %arg4[%c0_23, %c0_24] : memref<1x1xf32, #tpu.memory_space<vmem>>, vector<1x1xf32>
      tpu.vector_store %arg4[%c0_23, %c0_24], %43 {strides = array<i32>} : memref<1x1xf32, #tpu.memory_space<vmem>>, vector<1x1xf32>,
    } else {
    }
    return
  }
  func.func @transform_0(%arg0: i32) -> (i32, i32) {
    %c0_i32 = arith.constant 0 : i32
    %c0_i32_0 = arith.constant 0 : i32
    return %arg0, %c0_i32 : i32, i32
  }
  func.func @transform_1(%arg0: i32) -> (i32, i32) {
    %c0_i32 = arith.constant 0 : i32
    %c0_i32_0 = arith.constant 0 : i32
    return %arg0, %c0_i32 : i32, i32
  }
  func.func @transform_2(%arg0: i32) -> (i32, i32) {
    %c0_i32 = arith.constant 0 : i32
    %c0_i32_0 = arith.constant 0 : i32
    return %arg0, %c0_i32 : i32, i32
  }
  func.func @transform_3(%arg0: i32) -> (i32, i32) {
    %c0_i32 = arith.constant 0 : i32
    %c0_i32_0 = arith.constant 0 : i32
    %c0_i32_1 = arith.constant 0 : i32
    return %c0_i32, %c0_i32_0 : i32, i32
  }
}

</mosaic_0001>

<llo_original>
// kernel: tpu_custom_call.1
$region0: #{tpu_custom_call.1}
  #allocation0 [shape = 'u32[]', space=smem, size = 0x4, offset = 0x4, fixed_abs, tag = 'smem constant byte address 0x4 - core index']
  #allocation1 [shape = 'u32[144,128]{1,0:T(1,128)}', space=vmem, size = 0x12000, scoped, tag = 'internal scratch']
  #allocation2 [shape = 'f32[1,1]{1,0:T(1,128)}', space=vmem, size = 0x200, scoped, tag = 'scratch operand']
  %s0 = inlined_call_operand.hbm [shape: f32[8,32], index: 0, kind: input, shape index: {}]
  %s1 = inlined_call_operand.hbm [shape: f32[8,32], index: 1, kind: input, shape index: {}]
  %s2 = inlined_call_operand.hbm [shape: f32[8,32], index: 2, kind: input, shape index: {}]
  %s3 = inlined_call_operand.hbm [shape: f32[1,1], index: 3, kind: output, shape index: {}]
  %s4 = sld [smem:[#allocation0]]
  $region42: #{tpu_custom_call.1} parent=0
    _
  %s6 = ssub.s32 1, %s4
  %s7 = scalar_select 0, %s6, %s4
  $region1: #{tpu_custom_call.1} parent=0
    #allocation3 [shape = 'u8[4096]{0}', space=vmem, size = 0x1000, scoped, tag = 'input window, operand 0, single buffered']
    #allocation4 [shape = 's32[1]{0}', space=sflag, size = 0x4, scoped, tag = 'scoped memory for tpu_custom_call.1']
    #allocation5 [shape = 's32[1]{0}', space=sflag, size = 0x4, scoped, tag = 'scoped memory for tpu_custom_call.1']
    #allocation6 [shape = 'u8[4096]{0}', space=vmem, size = 0x1000, scoped, tag = 'input window, operand 1, single buffered']
    #allocation7 [shape = 's32[1]{0}', space=sflag, size = 0x4, scoped, tag = 'scoped memory for tpu_custom_call.1']
    #allocation8 [shape = 'u8[4096]{0}', space=vmem, size = 0x1000, scoped, tag = 'input window, operand 2, single buffered']
    #allocation9 [shape = 'u8[512]{0}', space=vmem, size = 0x400, scoped, tag = 'output window, operand 0, single buffered']
    %8 = vsyncpa [#allocation4], 0
    %9 = vsyncpa [#allocation7], 0
    %10 = vsyncpa [#allocation5], 0
    // Predicated region
    $region2: #{tpu_custom_call.1} parent=1 // pred_check
      _
    $region3: #{tpu_custom_call.1} parent=1 // pred_check_branch
      %12 = sbr.rel (0) target = $region5
    $region4: #{tpu_custom_call.1} parent=1 // pred_region
      %s14 = ssub.s32 128, 128
      %15 = vsyncadd [#allocation4], %s14
      %s17 = sshll.u32 [#allocation3], 4
      %s18 = int_to_ptr.vmem [resolvable:$true] %s17
      %20 = dma.hbm_to_vmem [thread:$0]  %s0, 128, %s18, [#allocation4]
    $region5: #{tpu_custom_call.1} parent=1 // pred_fallthru
      _
    // Predicated region
    $region6: #{tpu_custom_call.1} parent=1 // pred_check
      _
    $region7: #{tpu_custom_call.1} parent=1 // pred_check_branch
      %22 = sbr.rel (0) target = $region9
    $region8: #{tpu_custom_call.1} parent=1 // pred_region
      %s24 = ssub.s32 128, 128
      %25 = vsyncadd [#allocation7], %s24
      %s27 = sshll.u32 [#allocation6], 4
      %s28 = int_to_ptr.vmem [resolvable:$true] %s27
      %30 = dma.hbm_to_vmem [thread:$0]  %s1, 128, %s28, [#allocation7]
    $region9: #{tpu_custom_call.1} parent=1 // pred_fallthru
      _
    // Predicated region
    $region10: #{tpu_custom_call.1} parent=1 // pred_check
      _
    $region11: #{tpu_custom_call.1} parent=1 // pred_check_branch
      %32 = sbr.rel (0) target = $region13
    $region12: #{tpu_custom_call.1} parent=1 // pred_region
      %s34 = ssub.s32 128, 128
      %35 = vsyncadd [#allocation7], %s34
      %s37 = sshll.u32 [#allocation8], 4
      %s38 = int_to_ptr.vmem [resolvable:$true] %s37
      %40 = dma.hbm_to_vmem [thread:$0]  %s2, 128, %s38, [#allocation7]
    $region13: #{tpu_custom_call.1} parent=1 // pred_fallthru
      _
    // Predicated region
    $region14: #{tpu_custom_call.1} parent=1 // pred_check
      _
    $region15: #{tpu_custom_call.1} parent=1 // pred_check_branch
      %42 = sbr.rel (0) target = $region17
    $region16: #{tpu_custom_call.1} parent=1 // pred_region
      %43 = dma.done [#allocation4], 128
    $region17: #{tpu_custom_call.1} parent=1 // pred_fallthru
      _
    // Predicated region
    $region18: #{tpu_custom_call.1} parent=1 // pred_check
      _
    $region19: #{tpu_custom_call.1} parent=1 // pred_check_branch
      %45 = sbr.rel (0) target = $region21
    $region20: #{tpu_custom_call.1} parent=1 // pred_region
      %46 = dma.done [#allocation7], 128
    $region21: #{tpu_custom_call.1} parent=1 // pred_fallthru
      _
    // Predicated region
    $region22: #{tpu_custom_call.1} parent=1 // pred_check
      _
    $region23: #{tpu_custom_call.1} parent=1 // pred_check_branch
      %48 = sbr.rel (0) target = $region25
    $region24: #{tpu_custom_call.1} parent=1 // pred_region
      %49 = dma.done [#allocation7], 128
    $region25: #{tpu_custom_call.1} parent=1 // pred_fallthru
      _
    %p50 = scmp.eq.s32.totalorder 0, 0
    // Predicated region
    $region26: #{tpu_custom_call.1} parent=1 // pred_check
      %p51 = pneg %p50
    $region27: #{tpu_custom_call.1} parent=1 // pred_check_branch
      %53 = sbr.rel (%p51) target = $region29
    $region28: #{tpu_custom_call.1} parent=1 // pred_region
      %vm54 = vcmask 0
      %55 = vst.msk [vmem:[#allocation2] sm:$0x1] %vm54, 0.0
    $region29: #{tpu_custom_call.1} parent=1 // pred_fallthru
      _
    %v56 = vld [vmem:[#allocation3] sm:$0xff]
    %v57 = vld [vmem:[#allocation6] sm:$0xff]
    %v58 = vld [vmem:[#allocation8] sm:$0xff]
    %v59 = vsub.f32 %v56, %v57
    %v60 = vadd.f32 %v59, 1e-06
    %v61 = vmul.f32 %v60, %v60
    %vm62 = vcmask 261120
    %v63 = vsel %vm62, %v61, 0.0
    %64 = vadd.xlane.f32.xlu0 %v63
    %v65 = vpop.xlane.xlu0 %64
    %v66 = vrsqrt.pop %v65
    %v67 = vmul.f32 %v65, %v66
    %vm68 = vcmp.eq.f32.partialorder %v65, inf
    %v69 = vsel %vm68, %v65, %v67
    %vm70 = vcmp.eq.f32.partialorder %v65, 0.0
    %v71 = vand.u32 %v65, 2147483648
    %v72 = vsel %vm70, %v71, %v69
    %v73 = vsub.f32 %v56, %v58
    %v74 = vadd.f32 %v73, 1e-06
    %v75 = vmul.f32 %v74, %v74
    %v76 = vsel %vm62, %v75, 0.0
    %77 = vadd.xlane.f32.xlu0 %v76
    %v78 = vpop.xlane.xlu0 %77
    %v79 = vrsqrt.pop %v78
    %v80 = vmul.f32 %v78, %v79
    %vm81 = vcmp.eq.f32.partialorder %v78, inf
    %v82 = vsel %vm81, %v78, %v80
    %vm83 = vcmp.eq.f32.partialorder %v78, 0.0
    %v84 = vand.u32 %v78, 2147483648
    %v85 = vsel %vm83, %v84, %v82
    %v86 = vsub.f32 %v72, %v85
    %v87 = vadd.f32 %v86, 1.0
    %v88 = vmax.f32 %v87, 0.0
    %s89 = smul.u32 0, 8
    %v90 = vlaneseq
    %v91 = vshrl.u32 %v90, 7
    %v92 = vstv %s89
    %v93 = vadd.s32 %v92, %v91
    %vm94 = vcmp.lt.s32.totalorder %v93, 8
    %v95 = vsel %vm94, %v88, 0.0
    %v96 = vld [vmem:[#allocation2] sm:$0x1]
    %v97 = vrot.slane %v95, 4
    %v98 = vadd.f32 %v95, %v97
    %v99 = vrot.slane %v98, 2
    %v100 = vadd.f32 %v98, %v99
    %v101 = vrot.slane %v100, 1
    %v102 = vadd.f32 %v100, %v101
    %v103 = vadd.f32 %v96, %v102
    %vm104 = vcmask 0
    %105 = vst.msk [vmem:[#allocation2] sm:$0x1] %vm104, %v103
    // Predicated region
    $region30: #{tpu_custom_call.1} parent=1 // pred_check
      %p106 = pneg %p50
    $region31: #{tpu_custom_call.1} parent=1 // pred_check_branch
      %108 = sbr.rel (%p106) target = $region33
    $region32: #{tpu_custom_call.1} parent=1 // pred_region
      %v109 = vld [vmem:[#allocation2] sm:$0x1]
      %v110 = vmul.f32 %v109, 0.125
      %111 = vst.msk [vmem:[#allocation9] sm:$0x1] %vm104, %v110
    $region33: #{tpu_custom_call.1} parent=1 // pred_fallthru
      _
    // Predicated region
    $region34: #{tpu_custom_call.1} parent=1 // pred_check
      _
    $region35: #{tpu_custom_call.1} parent=1 // pred_check_branch
      %113 = sbr.rel (0) target = $region37
    $region36: #{tpu_custom_call.1} parent=1 // pred_region
      %s115 = ssub.s32 16, 16
      %116 = vsyncadd [#allocation5], %s115
      %s118 = sshll.u32 [#allocation9], 4
      %s119 = int_to_ptr.vmem [resolvable:$true] %s118
      %121 = dma.vmem_to_hbm [thread:$0]  %s119, 16, %s3, [#allocation5]
    $region37: #{tpu_custom_call.1} parent=1 // pred_fallthru
      _
    // Predicated region
    $region38: #{tpu_custom_call.1} parent=1 // pred_check
      _
    $region39: #{tpu_custom_call.1} parent=1 // pred_check_branch
      %123 = sbr.rel (0) target = $region41
    $region40: #{tpu_custom_call.1} parent=1 // pred_region
      %124 = dma.done [#allocation5], 16
    $region41: #{tpu_custom_call.1} parent=1 // pred_fallthru
      _
    %125 = vsyncpa [#allocation4], 1
    %126 = vsyncpa [#allocation7], 1
    %127 = vsyncpa [#allocation5], 1

</llo_original>
